<compile_context>
chip_gen: v5e
topology: v5e:2x2
jax: 0.10.0
libtpu: 0.0.40
codegen_flags: <defaults>
</compile_context>

<pallas_src>
import jax
import jax.numpy as jnp
from jax.experimental import pallas as pl
from jax.experimental.pallas import tpu as pltpu


# ---------------------------------------------------------------------------
# Kernel
# ---------------------------------------------------------------------------
def _mlp_kernel(x_ref, p_ref, o_ref):
    x = x_ref[...]                                   # (32, TILE) f32, batch on lanes

    # Static views into the resident parameter slab (8-row aligned blocks).
    w1 = p_ref[0:16, 0:32]                           # (16, 32)
    b1 = p_ref[0:16, 32:33]                          # (16, 1)
    w2 = p_ref[16:24, 0:16]                          # (8, 16)   BN1 folded in
    b2 = p_ref[16:24, 16:17]                         # (8, 1)
    w3 = p_ref[24:32, 0:8]                           # (8, 8)    BN2 folded, rows 4:8 zero
    b3 = p_ref[24:32, 16:17]                         # (8, 1)    rows 4:8 zero
    w4 = p_ref[32:33, 0:8]                           # (1, 8)    BN3 folded, cols 4:8 zero
    b4 = p_ref[32:33, 16:17]                         # (1, 1)

    # Linear -> ReLU chain (BN affines already absorbed into w2/b2, w3/b3, w4/b4).
    h = jnp.maximum(jnp.dot(w1, x, preferred_element_type=jnp.float32) + b1, 0.0)  # (16, T)
    h = jnp.maximum(jnp.dot(w2, h, preferred_element_type=jnp.float32) + b2, 0.0)  # (8, T)
    h = jnp.maximum(jnp.dot(w3, h, preferred_element_type=jnp.float32) + b3, 0.0)  # (8, T)
    z = jnp.dot(w4, h, preferred_element_type=jnp.float32) + b4                    # (1, T)

    # Sigmoid: exp hits the EUP slot; the reciprocal touches a single (1, TILE)
    # row per tile so an approx EUP reciprocal buys nothing measurable here and
    # we keep exact numerics.
    o_ref[...] = 1.0 / (1.0 + jnp.exp(-z))           # lane-dense (1, TILE) store


# ---------------------------------------------------------------------------
# Parameter preparation (run ONCE at parameter-load time)
# ---------------------------------------------------------------------------
def pack_params(params, eps=1e-5):
    """Fold eval-mode BatchNorm into the following Linear layer and pack all
    weights/biases into one zero-padded (40, 128) f32 slab."""
    def bn_fold(g, b, m, v):
        s = g / jnp.sqrt(v + eps)
        return s, b - m * s

    s1, t1 = bn_fold(params["bn1_g"], params["bn1_b"], params["bn1_m"], params["bn1_v"])
    s2, t2 = bn_fold(params["bn2_g"], params["bn2_b"], params["bn2_m"], params["bn2_v"])
    s3, t3 = bn_fold(params["bn3_g"], params["bn3_b"], params["bn3_m"], params["bn3_v"])

    # PyTorch nn.Linear stores weight as (out, in) -> already the W @ X form.
    w1, b1 = params["w1"], params["b1"]              # (16,32), (16,)
    w2 = params["w2"] * s1[None, :]                  # (8,16)
    b2 = params["w2"] @ t1 + params["b2"]            # (8,)
    w3 = params["w3"] * s2[None, :]                  # (4,8)
    b3 = params["w3"] @ t2 + params["b3"]            # (4,)
    w4 = params["w4"] * s3[None, :]                  # (1,4)
    b4 = params["w4"] @ t3 + params["b4"]            # (1,)

    slab = jnp.zeros((40, 128), jnp.float32)
    slab = slab.at[0:16, 0:32].set(w1.astype(jnp.float32))
    slab = slab.at[0:16, 32:33].set(b1.astype(jnp.float32)[:, None])
    slab = slab.at[16:24, 0:16].set(w2.astype(jnp.float32))
    slab = slab.at[16:24, 16:17].set(b2.astype(jnp.float32)[:, None])
    slab = slab.at[24:28, 0:8].set(w3.astype(jnp.float32))      # rows 28:32 stay zero
    slab = slab.at[24:28, 16:17].set(b3.astype(jnp.float32)[:, None])
    slab = slab.at[32:33, 0:4].set(w4.astype(jnp.float32))      # cols 4:8 stay zero
    slab = slab.at[32:33, 16:17].set(b4.astype(jnp.float32)[:, None])
    return slab


# ---------------------------------------------------------------------------
# Forward wrapper
# ---------------------------------------------------------------------------
def _round_up(a, b):
    return pl.cdiv(a, b) * b


def linear_x_forward(x, slab, *, tile_n=4096):
    """x: (N, 32) float32.  slab: output of pack_params().  Returns (N, 1)."""
    n = x.shape[0]
    tile = min(int(tile_n), int(_round_up(n, 128)))   # lane tile, multiple of 128
    n_pad = int(_round_up(n, tile))

    xt = jnp.transpose(x.astype(jnp.float32))          # (32, N): batch on lanes
    if n_pad != n:
        xt = jnp.pad(xt, ((0, 0), (0, n_pad - n)))

    out = pl.pallas_call(
        _mlp_kernel,
        out_shape=jax.ShapeDtypeStruct((1, n_pad), jnp.float32),
        grid_spec=pltpu.PrefetchScalarGridSpec(
            num_scalar_prefetch=0,
            grid=(n_pad // tile,),
            in_specs=[
                pl.BlockSpec((32, tile), lambda i: (0, i)),   # pipelined batch tiles
                pl.BlockSpec((40, 128), lambda i: (0, 0)),    # params stay resident
            ],
            out_specs=pl.BlockSpec((1, tile), lambda i: (0, i)),
        ),
        compiler_params=pltpu.CompilerParams(
            dimension_semantics=("parallel",)),
    )(xt, slab)

    return out[0, :n].reshape(n, 1)


# ---------------------------------------------------------------------------
# Reference (pure JAX, mirrors PyTorch eval-mode forward) + init
# ---------------------------------------------------------------------------
def reference_forward(x, params, eps=1e-5):
    def bn(h, g, b, m, v):
        return (h - m) / jnp.sqrt(v + eps) * g + b

    h = jnp.maximum(x @ params["w1"].T + params["b1"], 0.0)
    h = bn(h, params["bn1_g"], params["bn1_b"], params["bn1_m"], params["bn1_v"])
    h = jnp.maximum(h @ params["w2"].T + params["b2"], 0.0)
    h = bn(h, params["bn2_g"], params["bn2_b"], params["bn2_m"], params["bn2_v"])
    h = jnp.maximum(h @ params["w3"].T + params["b3"], 0.0)
    h = bn(h, params["bn3_g"], params["bn3_b"], params["bn3_m"], params["bn3_v"])
    z = h @ params["w4"].T + params["b4"]
    return 1.0 / (1.0 + jnp.exp(-z))


def init_params(key):
    """Shapes mirror Linear_x.__init__.  BN stats are randomized (instead of the
    PyTorch defaults gamma=1, beta=0, mean=0, var=1) so the BN fold is exercised."""
    ks = jax.random.split(key, 20)
    p = {}
    p["w1"] = jax.random.normal(ks[0], (16, 32), jnp.float32) * 0.2
    p["b1"] = jax.random.normal(ks[1], (16,), jnp.float32) * 0.1
    p["w2"] = jax.random.normal(ks[2], (8, 16), jnp.float32) * 0.2
    p["b2"] = jax.random.normal(ks[3], (8,), jnp.float32) * 0.1
    p["w3"] = jax.random.normal(ks[4], (4, 8), jnp.float32) * 0.2
    p["b3"] = jax.random.normal(ks[5], (4,), jnp.float32) * 0.1
    p["w4"] = jax.random.normal(ks[6], (1, 4), jnp.float32) * 0.2
    p["b4"] = jax.random.normal(ks[7], (1,), jnp.float32) * 0.1
    i = 8
    for idx, f in zip((1, 2, 3), (16, 8, 4)):
        p[f"bn{idx}_g"] = 1.0 + 0.1 * jax.random.normal(ks[i], (f,), jnp.float32)
        p[f"bn{idx}_b"] = 0.1 * jax.random.normal(ks[i + 1], (f,), jnp.float32)
        p[f"bn{idx}_m"] = 0.1 * jax.random.normal(ks[i + 2], (f,), jnp.float32)
        p[f"bn{idx}_v"] = 1.0 + jax.random.uniform(ks[i + 3], (f,), jnp.float32)
        i += 4
    return p


if __name__ == "__main__":
    key = jax.random.PRNGKey(0)
    k_x, k_p = jax.random.split(key)
    params = init_params(k_p)
    slab = pack_params(params)          # one-time parameter prep (BN fold + pack)

    # Small batch (single tile).
    batch = 8
    x = jax.random.normal(k_x, (batch, 32), jnp.float32)
    out = jax.block_until_ready(linear_x_forward(x, slab))
    ref = reference_forward(x, params)
    assert out.shape == (batch, 1) and out.dtype == jnp.float32
    assert bool(jnp.all((out >= 0.0) & (out <= 1.0)))
    assert bool(jnp.allclose(out, ref, atol=1e-5, rtol=1e-5)), \
        float(jnp.max(jnp.abs(out - ref)))

    # Ragged larger batch with a small tile: exercises multi-step pipelined grid
    # and the lane-padding path.
    n2 = 3000
    x2 = jax.random.normal(k_x, (n2, 32), jnp.float32)
    out2 = jax.block_until_ready(linear_x_forward(x2, slab, tile_n=512))
    ref2 = reference_forward(x2, params)
    assert out2.shape == (n2, 1)
    assert bool(jnp.allclose(out2, ref2, atol=1e-5, rtol=1e-5)), \
        float(jnp.max(jnp.abs(out2 - ref2)))

    print("KERNEL_OK")
</pallas_src>

<mosaic_0001>
module attributes {stable_mosaic.version = 11 : i64} {
  func.func @_mlp_kernel(%arg0: i32, %arg1: memref<32x128xf32, #tpu.memory_space<vmem>>, %arg2: memref<40x128xf32, #tpu.memory_space<vmem>>, %arg3: memref<1x128xf32, #tpu.memory_space<vmem>>) attributes {dimension_semantics = [#tpu.dimension_semantics<parallel>], iteration_bounds = array<i64: 1>, scalar_prefetch = 0 : i64, scratch_operands = 0 : i64, tpu.core_type = #tpu.core_type<tc>, window_params = [{transform_indices = @transform_0, window_bounds = array<i64: 32, 128>}, {pipeline_mode = #tpu.pipeline_mode<synchronous>, transform_indices = @transform_1, window_bounds = array<i64: 40, 128>}, {transform_indices = @transform_2, window_bounds = array<i64: 1, 128>}]} {
    %c0 = arith.constant 0 : index
    %c0_0 = arith.constant 0 : index
    %0 = vector.load %arg1[%c0, %c0_0] : memref<32x128xf32, #tpu.memory_space<vmem>>, vector<32x128xf32>
    %c0_1 = arith.constant 0 : index
    %c0_2 = arith.constant 0 : index
    %1 = vector.load %arg2[%c0_1, %c0_2] : memref<40x128xf32, #tpu.memory_space<vmem>>, vector<16x32xf32>
    %c0_3 = arith.constant 0 : index
    %c32 = arith.constant 32 : index
    %2 = vector.load %arg2[%c0_3, %c32] : memref<40x128xf32, #tpu.memory_space<vmem>>, vector<16x1xf32>
    %c16 = arith.constant 16 : index
    %c0_4 = arith.constant 0 : index
    %3 = vector.load %arg2[%c16, %c0_4] : memref<40x128xf32, #tpu.memory_space<vmem>>, vector<8x16xf32>
    %c16_5 = arith.constant 16 : index
    %c16_6 = arith.constant 16 : index
    %4 = vector.load %arg2[%c16_5, %c16_6] : memref<40x128xf32, #tpu.memory_space<vmem>>, vector<8x1xf32>
    %c24 = arith.constant 24 : index
    %c0_7 = arith.constant 0 : index
    %5 = vector.load %arg2[%c24, %c0_7] : memref<40x128xf32, #tpu.memory_space<vmem>>, vector<8x8xf32>
    %c24_8 = arith.constant 24 : index
    %c16_9 = arith.constant 16 : index
    %6 = vector.load %arg2[%c24_8, %c16_9] : memref<40x128xf32, #tpu.memory_space<vmem>>, vector<8x1xf32>
    %c32_10 = arith.constant 32 : index
    %c0_11 = arith.constant 0 : index
    %7 = vector.load %arg2[%c32_10, %c0_11] : memref<40x128xf32, #tpu.memory_space<vmem>>, vector<1x8xf32>
    %c32_12 = arith.constant 32 : index
    %c16_13 = arith.constant 16 : index
    %8 = vector.load %arg2[%c32_12, %c16_13] : memref<40x128xf32, #tpu.memory_space<vmem>>, vector<1x1xf32>
    %cst = arith.constant dense<0.000000e+00> : vector<16x128xf32>
    %9 = tpu.matmul %1, %0, %cst {dimension_numbers = #tpu.dot_dimension_numbers<[1], [0], [0], [1], [0, 0, 1, 1], [], []>} : vector<16x32xf32>, vector<32x128xf32>, vector<16x128xf32> -> vector<16x128xf32>
    %10 = vector.broadcast %2 : vector<16x1xf32> to vector<16x128xf32>
    %11 = arith.addf %9, %10 : vector<16x128xf32>
    %cst_14 = arith.constant 0.000000e+00 : f32
    %12 = vector.broadcast %cst_14 : f32 to vector<16x128xf32>
    %13 = arith.maximumf %11, %12 : vector<16x128xf32>
    %cst_15 = arith.constant dense<0.000000e+00> : vector<8x128xf32>
    %14 = tpu.matmul %3, %13, %cst_15 {dimension_numbers = #tpu.dot_dimension_numbers<[1], [0], [0], [1], [0, 0, 1, 1], [], []>} : vector<8x16xf32>, vector<16x128xf32>, vector<8x128xf32> -> vector<8x128xf32>
    %15 = vector.broadcast %4 : vector<8x1xf32> to vector<8x128xf32>
    %16 = arith.addf %14, %15 : vector<8x128xf32>
    %cst_16 = arith.constant 0.000000e+00 : f32
    %17 = vector.broadcast %cst_16 : f32 to vector<8x128xf32>
    %18 = arith.maximumf %16, %17 : vector<8x128xf32>
    %cst_17 = arith.constant dense<0.000000e+00> : vector<8x128xf32>
    %19 = tpu.matmul %5, %18, %cst_17 {dimension_numbers = #tpu.dot_dimension_numbers<[1], [0], [0], [1], [0, 0, 1, 1], [], []>} : vector<8x8xf32>, vector<8x128xf32>, vector<8x128xf32> -> vector<8x128xf32>
    %20 = vector.broadcast %6 : vector<8x1xf32> to vector<8x128xf32>
    %21 = arith.addf %19, %20 : vector<8x128xf32>
    %cst_18 = arith.constant 0.000000e+00 : f32
    %22 = vector.broadcast %cst_18 : f32 to vector<8x128xf32>
    %23 = arith.maximumf %21, %22 : vector<8x128xf32>
    %cst_19 = arith.constant dense<0.000000e+00> : vector<1x128xf32>
    %24 = tpu.matmul %7, %23, %cst_19 {dimension_numbers = #tpu.dot_dimension_numbers<[1], [0], [0], [1], [0, 0, 1, 1], [], []>} : vector<1x8xf32>, vector<8x128xf32>, vector<1x128xf32> -> vector<1x128xf32>
    %25 = vector.broadcast %8 : vector<1x1xf32> to vector<1x128xf32>
    %26 = arith.addf %24, %25 : vector<1x128xf32>
    %cst_20 = arith.constant 0.000000e+00 : f32
    %27 = vector.broadcast %cst_20 : f32 to vector<1x128xf32>
    %28 = arith.subf %27, %26 : vector<1x128xf32>
    %29 = math.exp %28 : vector<1x128xf32>
    %cst_21 = arith.constant 1.000000e+00 : f32
    %30 = vector.broadcast %cst_21 : f32 to vector<1x128xf32>
    %31 = arith.addf %30, %29 : vector<1x128xf32>
    %cst_22 = arith.constant 1.000000e+00 : f32
    %32 = vector.broadcast %cst_22 : f32 to vector<1x128xf32>
    %33 = arith.divf %32, %31 : vector<1x128xf32>
    %c0_23 = arith.constant 0 : index
    %c0_24 = arith.constant 0 : index
    %34 = vector.load %arg3[%c0_23, %c0_24] : memref<1x128xf32, #tpu.memory_space<vmem>>, vector<1x128xf32>
    tpu.vector_store %arg3[%c0_23, %c0_24], %33 {strides = array<i32>} : memref<1x128xf32, #tpu.memory_space<vmem>>, vector<1x128xf32>,
    return
  }
  func.func @transform_0(%arg0: i32) -> (i32, i32) {
    %c0_i32 = arith.constant 0 : i32
    %c0_i32_0 = arith.constant 0 : i32
    return %c0_i32, %arg0 : i32, i32
  }
  func.func @transform_1(%arg0: i32) -> (i32, i32) {
    %c0_i32 = arith.constant 0 : i32
    %c0_i32_0 = arith.constant 0 : i32
    %c0_i32_1 = arith.constant 0 : i32
    return %c0_i32, %c0_i32_0 : i32, i32
  }
  func.func @transform_2(%arg0: i32) -> (i32, i32) {
    %c0_i32 = arith.constant 0 : i32
    %c0_i32_0 = arith.constant 0 : i32
    return %c0_i32, %arg0 : i32, i32
  }
}

</mosaic_0001>

<llo_original>
// kernel: tpu_custom_call.1
$region0: #{tpu_custom_call.1}
  #allocation0 [shape = 'u32[]', space=smem, size = 0x4, offset = 0x4, fixed_abs, tag = 'smem constant byte address 0x4 - core index']
  #allocation1 [shape = 'u32[72,128]{1,0:T(1,128)}', space=vmem, size = 0x9000, scoped, tag = 'internal scratch']
  %s0 = inlined_call_operand.hbm [shape: f32[32,128], index: 0, kind: input, shape index: {}]
  %s1 = inlined_call_operand.hbm [shape: f32[40,128], index: 1, kind: input, shape index: {}]
  %s2 = inlined_call_operand.hbm [shape: f32[1,128], index: 2, kind: output, shape index: {}]
  %s3 = sld [smem:[#allocation0]]
  $region26: #{tpu_custom_call.1} parent=0
    _
  %s5 = ssub.s32 1, %s3
  %s6 = scalar_select 0, %s5, %s3
  $region1: #{tpu_custom_call.1} parent=0
    #allocation2 [shape = 'u8[16384]{0}', space=vmem, size = 0x4000, scoped, tag = 'input window, operand 0, single buffered']
    #allocation3 [shape = 's32[1]{0}', space=sflag, size = 0x4, scoped, tag = 'scoped memory for tpu_custom_call.1']
    #allocation4 [shape = 's32[1]{0}', space=sflag, size = 0x4, scoped, tag = 'scoped memory for tpu_custom_call.1']
    #allocation5 [shape = 'u8[20480]{0}', space=vmem, size = 0x5000, scoped, tag = 'input window, operand 1, single buffered']
    #allocation6 [shape = 's32[1]{0}', space=sflag, size = 0x4, scoped, tag = 'scoped memory for tpu_custom_call.1']
    #allocation7 [shape = 'u8[512]{0}', space=vmem, size = 0x400, scoped, tag = 'output window, operand 0, single buffered']
    %7 = vsyncpa [#allocation3], 0
    %8 = vsyncpa [#allocation6], 0
    %9 = vsyncpa [#allocation4], 0
    // Predicated region
    $region2: #{tpu_custom_call.1} parent=1 // pred_check
      _
    $region3: #{tpu_custom_call.1} parent=1 // pred_check_branch
      %11 = sbr.rel (0) target = $region5
    $region4: #{tpu_custom_call.1} parent=1 // pred_region
      %13 = vsyncadd [#allocation3], 0
      %s14 = sshll.u32 %s0, 4
      %s15 = int_to_ptr.hbm [resolvable:$true] %s14
      %s16 = sshll.u32 [#allocation2], 4
      %s17 = int_to_ptr.vmem [resolvable:$true] %s16
      %22 = dma.hbm_to_vmem [thread:$0]  %s15, 512, %s17, [#allocation3], 128, 128, 8
    $region5: #{tpu_custom_call.1} parent=1 // pred_fallthru
      _
    // Predicated region
    $region6: #{tpu_custom_call.1} parent=1 // pred_check
      _
    $region7: #{tpu_custom_call.1} parent=1 // pred_check_branch
      %24 = sbr.rel (0) target = $region9
    $region8: #{tpu_custom_call.1} parent=1 // pred_region
      %26 = vsyncadd [#allocation6], 0
      %s27 = sshll.u32 %s1, 4
      %s28 = int_to_ptr.hbm [resolvable:$true] %s27
      %s29 = sshll.u32 [#allocation5], 4
      %s30 = int_to_ptr.vmem [resolvable:$true] %s29
      %35 = dma.hbm_to_vmem [thread:$0]  %s28, 640, %s30, [#allocation6], 128, 128, 8
    $region9: #{tpu_custom_call.1} parent=1 // pred_fallthru
      _
    // Predicated region
    $region10: #{tpu_custom_call.1} parent=1 // pred_check
      _
    $region11: #{tpu_custom_call.1} parent=1 // pred_check_branch
      %37 = sbr.rel (0) target = $region13
    $region12: #{tpu_custom_call.1} parent=1 // pred_region
      %39 = dma.done [#allocation3], 512
    $region13: #{tpu_custom_call.1} parent=1 // pred_fallthru
      _
    // Predicated region
    $region14: #{tpu_custom_call.1} parent=1 // pred_check
      _
    $region15: #{tpu_custom_call.1} parent=1 // pred_check_branch
      %41 = sbr.rel (0) target = $region17
    $region16: #{tpu_custom_call.1} parent=1 // pred_region
      %43 = dma.done [#allocation6], 640
    $region17: #{tpu_custom_call.1} parent=1 // pred_fallthru
      _
    %v44 = vld [vmem:[#allocation2] sm:$0xff]
    %v45 = vld [vmem:[#allocation2 + $0x8] sm:$0xff]
    %v46 = vld [vmem:[#allocation2 + $0x10] sm:$0xff]
    %v47 = vld [vmem:[#allocation2 + $0x18] sm:$0xff]
    %v48 = vld [vmem:[#allocation5] sm:$0xff]
    %v49 = vld [vmem:[#allocation5 + $0x8] sm:$0xff]
    %v50 = vld [vmem:[#allocation5 + $0x10] sm:$0xff]
    %v51 = vld [vmem:[#allocation5 + $0x18] sm:$0xff]
    %v52 = vld [vmem:[#allocation5 + $0x20] sm:$0x1]
    %54 = vset.pattern.permute.xlu0 32
    %55 = vperm.xlu0 %54, %v48
    %v56 = vpop.permute.xlu0 %55
    %59 = vset.pattern.permute.xlu0 32
    %60 = vperm.xlu0 %59, %v49
    %v61 = vpop.permute.xlu0 %60
    %vm63 = vcmask 261120
    %v64 = vsel %vm63, %v48, 0
    %v66 = vsel %vm63, %v49, 0
    %68 = vmatpush.msra.mxu0 0.0
    %69 = vmatpush.msra.mxu0 0.0
    %70 = vmatpush.msra.mxu0 0.0
    %71 = vmatpush.msra.mxu0 0.0
    %72 = vmatpush.msra.mxu0 0.0
    %73 = vmatpush.msra.mxu0 0.0
    %74 = vmatpush.msra.mxu0 0.0
    %75 = vmatpush.msra.mxu0 0.0
    %76 = vmatpush.msra.mxu0 0.0
    %77 = vmatpush.msra.mxu0 0.0
    %78 = vmatpush.msra.mxu0 0.0
    %79 = vmatpush.msra.mxu0 0.0
    %80 = vmatpush.msra.mxu0 %v47
    %81 = vmatpush.msra.mxu0 %v46
    %82 = vmatpush.msra.mxu0 %v45
    %83 = vmatpush.msra.mxu0 %v44
    %84 = vmatmul.f32.gmra.mxu0 %v64
    %v85 = vpop.f32.mrf.mxu0
    %v86 = vadd.f32 %v56, %v85
    %87 = vmatmul.f32.gmra.mxu0 %v66
    %v88 = vpop.f32.mrf.mxu0
    %v89 = vadd.f32 %v61, %v88
    %90 = vdwg.mxu0
    %v91 = vmax.f32 %v86, 0.0
    %v92 = vmax.f32 %v89, 0.0
    %94 = vset.pattern.permute.xlu0 16
    %95 = vperm.xlu0 %94, %v50
    %v96 = vpop.permute.xlu0 %95
    %vm98 = vcmask 130048
    %v99 = vsel %vm98, %v50, 0
    %101 = vmatpush.msra.mxu0 0.0
    %102 = vmatpush.msra.mxu0 0.0
    %103 = vmatpush.msra.mxu0 0.0
    %104 = vmatpush.msra.mxu0 0.0
    %105 = vmatpush.msra.mxu0 0.0
    %106 = vmatpush.msra.mxu0 0.0
    %107 = vmatpush.msra.mxu0 0.0
    %108 = vmatpush.msra.mxu0 0.0
    %109 = vmatpush.msra.mxu0 0.0
    %110 = vmatpush.msra.mxu0 0.0
    %111 = vmatpush.msra.mxu0 0.0
    %112 = vmatpush.msra.mxu0 0.0
    %113 = vmatpush.msra.mxu0 0.0
    %114 = vmatpush.msra.mxu0 0.0
    %115 = vmatpush.msra.mxu0 %v92
    %116 = vmatpush.msra.mxu0 %v91
    %117 = vmatmul.f32.gmra.mxu0 %v99
    %v118 = vpop.f32.mrf.mxu0
    %v119 = vadd.f32 %v96, %v118
    %120 = vdwg.mxu0
    %v121 = vmax.f32 %v119, 0.0
    %123 = vset.pattern.permute.xlu0 16
    %124 = vperm.xlu0 %123, %v51
    %v125 = vpop.permute.xlu0 %124
    %vm127 = vcmask 64512
    %v128 = vsel %vm127, %v51, 0
    %130 = vmatpush.msra.mxu0 0.0
    %131 = vmatpush.msra.mxu0 0.0
    %132 = vmatpush.msra.mxu0 0.0
    %133 = vmatpush.msra.mxu0 0.0
    %134 = vmatpush.msra.mxu0 0.0
    %135 = vmatpush.msra.mxu0 0.0
    %136 = vmatpush.msra.mxu0 0.0
    %137 = vmatpush.msra.mxu0 0.0
    %138 = vmatpush.msra.mxu0 0.0
    %139 = vmatpush.msra.mxu0 0.0
    %140 = vmatpush.msra.mxu0 0.0
    %141 = vmatpush.msra.mxu0 0.0
    %142 = vmatpush.msra.mxu0 0.0
    %143 = vmatpush.msra.mxu0 0.0
    %144 = vmatpush.msra.mxu0 0.0
    %145 = vmatpush.msra.mxu0 %v121
    %146 = vmatmul.f32.gmra.mxu0 %v128
    %v147 = vpop.f32.mrf.mxu0
    %v148 = vadd.f32 %v125, %v147
    %149 = vdwg.mxu0
    %v150 = vmax.f32 %v148, 0.0
    %152 = vset.pattern.permute.xlu0 16
    %153 = vperm.xlu0 %152, %v52
    %v154 = vpop.permute.xlu0 %153
    %v156 = vsel %vm127, %v52, 0
    %158 = vmatpush.msra.mxu0 0.0
    %159 = vmatpush.msra.mxu0 0.0
    %160 = vmatpush.msra.mxu0 0.0
    %161 = vmatpush.msra.mxu0 0.0
    %162 = vmatpush.msra.mxu0 0.0
    %163 = vmatpush.msra.mxu0 0.0
    %164 = vmatpush.msra.mxu0 0.0
    %165 = vmatpush.msra.mxu0 0.0
    %166 = vmatpush.msra.mxu0 0.0
    %167 = vmatpush.msra.mxu0 0.0
    %168 = vmatpush.msra.mxu0 0.0
    %169 = vmatpush.msra.mxu0 0.0
    %170 = vmatpush.msra.mxu0 0.0
    %171 = vmatpush.msra.mxu0 0.0
    %172 = vmatpush.msra.mxu0 0.0
    %173 = vmatpush.msra.mxu0 %v150
    %174 = vmatmul.f32.gmra.mxu0 %v156
    %v175 = vpop.f32.mrf.mxu0
    %v176 = vadd.f32 %v154, %v175
    %177 = vdwg.mxu0
    %v178 = vsub.f32 0.0, %v176
    %v179 = vmul.f32 %v178, 1.442695
    %v180 = vpow.pop %v179
    %v181 = vadd.f32 %v180, 1.0
    %v182 = vrcp.pop %v181
    %v183 = vmul.f32 %v181, %v182
    %v184 = vsub.f32 1.0, %v183
    %v185 = vmul.f32 %v182, %v184
    %v186 = vadd.f32 %v182, %v185
    %vm187 = vweird.f32 %v181
    %vm188 = vweird.f32 %v182
    %vm189 = vmor %vm187, %vm188
    %v190 = vsel %vm189, %v182, %v186
    %v191 = vand.u32 2147483647, %v181
    %vm192 = vcmp.eq.f32.partialorder %v191, 8.507059e+37
    %v193 = vand.u32 %v181, 2147483648
    %v194 = vor.u32 1.1754944e-38, %v193
    %v195 = vsel %vm192, %v194, %v190
    %v196 = vmul.f32 1.0, %v195
    %197 = vst [vmem:[#allocation7] sm:$0x1] %v196
    // Predicated region
    $region18: #{tpu_custom_call.1} parent=1 // pred_check
      _
    $region19: #{tpu_custom_call.1} parent=1 // pred_check_branch
      %199 = sbr.rel (0) target = $region21
    $region20: #{tpu_custom_call.1} parent=1 // pred_region
      %201 = vsyncadd [#allocation4], 0
      %s203 = sshll.u32 [#allocation7], 4
      %s204 = int_to_ptr.vmem [resolvable:$true] %s203
      %s205 = sshll.u32 %s2, 4
      %s206 = int_to_ptr.hbm [resolvable:$true] %s205
      %208 = dma.vmem_to_hbm [thread:$0]  %s204, 16, %s206, [#allocation4]
    $region21: #{tpu_custom_call.1} parent=1 // pred_fallthru
      _
    // Predicated region
    $region22: #{tpu_custom_call.1} parent=1 // pred_check
      _
    $region23: #{tpu_custom_call.1} parent=1 // pred_check_branch
      %210 = sbr.rel (0) target = $region25
    $region24: #{tpu_custom_call.1} parent=1 // pred_region
      %212 = dma.done [#allocation4], 16
    $region25: #{tpu_custom_call.1} parent=1 // pred_fallthru
      _
    %213 = vsyncpa [#allocation3], 1
    %214 = vsyncpa [#allocation6], 1
    %215 = vsyncpa [#allocation4], 1

</llo_original>
